<compile_context>
chip_gen: v7x
topology: tpu7x:2x2x1
jax: 0.10.0
libtpu: 0.0.40
codegen_flags: <defaults>
</compile_context>

<pallas_src>
import functools

import jax
import jax.numpy as jnp
from jax.experimental import pallas as pl
from jax.experimental.pallas import tpu as pltpu

LANE = 128
IN1, OUT1 = 4, 8
IN2, OUT2 = 8, 4
IN3, OUT3 = 4, 1


def _sigmoid(v):
    # EUP-friendly sigmoid: one tanh instead of exp + add + divide (no VALU divide).
    return 0.5 * jnp.tanh(0.5 * v) + 0.5


def mlp_kernel(w1_ref, b1_ref, w2_ref, b2_ref, w3_ref, b3_ref, x_ref, o_ref):
    """Activations are lists of (1, TB) lane-dense vectors (batch on lanes).

    w*_ref / b*_ref are SMEM scalars; each layer is an unrolled broadcast-FMA
    so the MXU never sits on the critical path.
    """
    x = x_ref[...]                                    # (4, TB) f32
    rows = [x[i:i + 1, :] for i in range(IN1)]        # 4 x (1, TB)

    def layer(rows_in, w_ref, b_ref, n_in, n_out):
        rows_out = []
        for j in range(n_out):
            acc = rows_in[0] * w_ref[0, j]
            for i in range(1, n_in):
                acc = acc + rows_in[i] * w_ref[i, j]
            rows_out.append(_sigmoid(acc + b_ref[j]))
        return rows_out

    h1 = layer(rows, w1_ref, b1_ref, IN1, OUT1)       # 8 x (1, TB)
    h2 = layer(h1, w2_ref, b2_ref, IN2, OUT2)         # 4 x (1, TB)
    h3 = layer(h2, w3_ref, b3_ref, IN3, OUT3)         # 1 x (1, TB)
    o_ref[...] = h3[0]                                # (1, TB) lane-dense store


@functools.partial(jax.jit, static_argnames=("block_b",))
def mlp_forward(x, params, *, block_b=1024):
    """x: (B, 4) f32 -> (B, 1) f32 (matches torch forward)."""
    w1, b1, w2, b2, w3, b3 = params
    B = x.shape[0]

    # Batch goes on the lane axis; pad to a lane-aligned multiple of the block.
    tb = min(block_b, max(LANE, ((B + LANE - 1) // LANE) * LANE))
    bp = ((B + tb - 1) // tb) * tb
    xt = jnp.pad(x.T.astype(jnp.float32), ((0, 0), (0, bp - B)))   # (4, bp)

    smem = pl.BlockSpec(memory_space=pltpu.SMEM)      # params resident across grid steps

    out = pl.pallas_call(
        mlp_kernel,
        out_shape=jax.ShapeDtypeStruct((1, bp), jnp.float32),
        grid=(bp // tb,),
        in_specs=[smem, smem, smem, smem, smem, smem,
                  pl.BlockSpec((IN1, tb), lambda i: (0, i))],
        out_specs=pl.BlockSpec((1, tb), lambda i: (0, i)),
        compiler_params=pltpu.CompilerParams(
            dimension_semantics=("parallel",),        # shard batch over TCs on v7x
            vmem_limit_bytes=64 * 1024 * 1024,
        ),
    )(w1, b1, w2, b2, w3, b3, xt)

    return out[0, :B].reshape(B, 1)


def init_params(key):
    """Deterministic init mimicking torch.nn.Linear uniform(-1/sqrt(in), 1/sqrt(in))."""
    def linear(k, fan_in, fan_out):
        kw, kb = jax.random.split(k)
        bound = 1.0 / (fan_in ** 0.5)
        # stored as (in, out) so math is x @ W (== torch x @ W.T)
        w = jax.random.uniform(kw, (fan_in, fan_out), jnp.float32, -bound, bound)
        b = jax.random.uniform(kb, (fan_out,), jnp.float32, -bound, bound)
        return w, b

    k1, k2, k3 = jax.random.split(key, 3)
    w1, b1 = linear(k1, IN1, OUT1)
    w2, b2 = linear(k2, IN2, OUT2)
    w3, b3 = linear(k3, IN3, OUT3)
    return (w1, b1, w2, b2, w3, b3)


def reference_forward(x, params):
    w1, b1, w2, b2, w3, b3 = params
    h = jax.nn.sigmoid(x @ w1 + b1)
    h = jax.nn.sigmoid(h @ w2 + b2)
    return jax.nn.sigmoid(h @ w3 + b3)


if __name__ == "__main__":
    key = jax.random.PRNGKey(0)
    kx, kp = jax.random.split(key)
    params = init_params(kp)

    # Non-multiple-of-128 batch exercises padding + a multi-step (pipelined) grid.
    batch = 300
    x = jax.random.normal(kx, (batch, IN1), dtype=jnp.float32)

    out = mlp_forward(x, params, block_b=128)
    jax.block_until_ready(out)

    ref = reference_forward(x, params)
    assert out.shape == (batch, 1)
    assert jnp.allclose(out, ref, atol=1e-5, rtol=1e-5)

    # Tiny batch (grid of 1, heavy lane padding) also matches.
    x_small = jax.random.normal(kx, (8, IN1), dtype=jnp.float32)
    out_small = mlp_forward(x_small, params)
    jax.block_until_ready(out_small)
    assert out_small.shape == (8, 1)
    assert jnp.allclose(out_small, reference_forward(x_small, params), atol=1e-5, rtol=1e-5)

    print("KERNEL_OK")
</pallas_src>

<mosaic_0001>
module attributes {stable_mosaic.version = 11 : i64} {
  func.func @mlp_kernel(%arg0: i32, %arg1: memref<4x8xf32, #tpu.memory_space<smem>>, %arg2: memref<8xf32, #tpu.memory_space<smem>>, %arg3: memref<8x4xf32, #tpu.memory_space<smem>>, %arg4: memref<4xf32, #tpu.memory_space<smem>>, %arg5: memref<4x1xf32, #tpu.memory_space<smem>>, %arg6: memref<1xf32, #tpu.memory_space<smem>>, %arg7: memref<4x128xf32, #tpu.memory_space<vmem>>, %arg8: memref<1x128xf32, #tpu.memory_space<vmem>>) attributes {dimension_semantics = [#tpu.dimension_semantics<parallel>], iteration_bounds = array<i64: 3>, scalar_prefetch = 0 : i64, scratch_operands = 0 : i64, tpu.core_type = #tpu.core_type<tc>, window_params = [{transform_indices = @transform_0, window_bounds = array<i64: 4, 8>}, {transform_indices = @transform_1, window_bounds = array<i64: 8>}, {transform_indices = @transform_2, window_bounds = array<i64: 8, 4>}, {transform_indices = @transform_3, window_bounds = array<i64: 4>}, {transform_indices = @transform_4, window_bounds = array<i64: 4, 1>}, {transform_indices = @transform_5, window_bounds = array<i64: 1>}, {transform_indices = @transform_6, window_bounds = array<i64: 4, 128>}, {transform_indices = @transform_7, window_bounds = array<i64: 1, 128>}]} {
    %c0 = arith.constant 0 : index
    %c0_0 = arith.constant 0 : index
    %0 = vector.load %arg7[%c0, %c0_0] : memref<4x128xf32, #tpu.memory_space<vmem>>, vector<4x128xf32>
    %1 = vector.extract_strided_slice %0 {offsets = [0, 0], sizes = [1, 128], strides = [1, 1]} : vector<4x128xf32> to vector<1x128xf32>
    %2 = vector.extract_strided_slice %0 {offsets = [1, 0], sizes = [1, 128], strides = [1, 1]} : vector<4x128xf32> to vector<1x128xf32>
    %3 = vector.extract_strided_slice %0 {offsets = [2, 0], sizes = [1, 128], strides = [1, 1]} : vector<4x128xf32> to vector<1x128xf32>
    %4 = vector.extract_strided_slice %0 {offsets = [3, 0], sizes = [1, 128], strides = [1, 1]} : vector<4x128xf32> to vector<1x128xf32>
    %c0_1 = arith.constant 0 : index
    %c0_2 = arith.constant 0 : index
    %5 = memref.load %arg1[%c0_1, %c0_2] : memref<4x8xf32, #tpu.memory_space<smem>>
    %6 = vector.broadcast %5 : f32 to vector<1x128xf32>
    %7 = arith.mulf %1, %6 : vector<1x128xf32>
    %c1 = arith.constant 1 : index
    %c0_3 = arith.constant 0 : index
    %8 = memref.load %arg1[%c1, %c0_3] : memref<4x8xf32, #tpu.memory_space<smem>>
    %9 = vector.broadcast %8 : f32 to vector<1x128xf32>
    %10 = arith.mulf %2, %9 : vector<1x128xf32>
    %11 = arith.addf %7, %10 : vector<1x128xf32>
    %c2 = arith.constant 2 : index
    %c0_4 = arith.constant 0 : index
    %12 = memref.load %arg1[%c2, %c0_4] : memref<4x8xf32, #tpu.memory_space<smem>>
    %13 = vector.broadcast %12 : f32 to vector<1x128xf32>
    %14 = arith.mulf %3, %13 : vector<1x128xf32>
    %15 = arith.addf %11, %14 : vector<1x128xf32>
    %c3 = arith.constant 3 : index
    %c0_5 = arith.constant 0 : index
    %16 = memref.load %arg1[%c3, %c0_5] : memref<4x8xf32, #tpu.memory_space<smem>>
    %17 = vector.broadcast %16 : f32 to vector<1x128xf32>
    %18 = arith.mulf %4, %17 : vector<1x128xf32>
    %19 = arith.addf %15, %18 : vector<1x128xf32>
    %c0_6 = arith.constant 0 : index
    %20 = memref.load %arg2[%c0_6] : memref<8xf32, #tpu.memory_space<smem>>
    %21 = vector.broadcast %20 : f32 to vector<1x128xf32>
    %22 = arith.addf %19, %21 : vector<1x128xf32>
    %cst = arith.constant 5.000000e-01 : f32
    %23 = vector.broadcast %cst : f32 to vector<1x128xf32>
    %24 = arith.mulf %23, %22 : vector<1x128xf32>
    %25 = math.tanh %24 : vector<1x128xf32>
    %cst_7 = arith.constant 5.000000e-01 : f32
    %26 = vector.broadcast %cst_7 : f32 to vector<1x128xf32>
    %27 = arith.mulf %26, %25 : vector<1x128xf32>
    %cst_8 = arith.constant 5.000000e-01 : f32
    %28 = vector.broadcast %cst_8 : f32 to vector<1x128xf32>
    %29 = arith.addf %27, %28 : vector<1x128xf32>
    %c0_9 = arith.constant 0 : index
    %c1_10 = arith.constant 1 : index
    %30 = memref.load %arg1[%c0_9, %c1_10] : memref<4x8xf32, #tpu.memory_space<smem>>
    %31 = vector.broadcast %30 : f32 to vector<1x128xf32>
    %32 = arith.mulf %1, %31 : vector<1x128xf32>
    %c1_11 = arith.constant 1 : index
    %c1_12 = arith.constant 1 : index
    %33 = memref.load %arg1[%c1_11, %c1_12] : memref<4x8xf32, #tpu.memory_space<smem>>
    %34 = vector.broadcast %33 : f32 to vector<1x128xf32>
    %35 = arith.mulf %2, %34 : vector<1x128xf32>
    %36 = arith.addf %32, %35 : vector<1x128xf32>
    %c2_13 = arith.constant 2 : index
    %c1_14 = arith.constant 1 : index
    %37 = memref.load %arg1[%c2_13, %c1_14] : memref<4x8xf32, #tpu.memory_space<smem>>
    %38 = vector.broadcast %37 : f32 to vector<1x128xf32>
    %39 = arith.mulf %3, %38 : vector<1x128xf32>
    %40 = arith.addf %36, %39 : vector<1x128xf32>
    %c3_15 = arith.constant 3 : index
    %c1_16 = arith.constant 1 : index
    %41 = memref.load %arg1[%c3_15, %c1_16] : memref<4x8xf32, #tpu.memory_space<smem>>
    %42 = vector.broadcast %41 : f32 to vector<1x128xf32>
    %43 = arith.mulf %4, %42 : vector<1x128xf32>
    %44 = arith.addf %40, %43 : vector<1x128xf32>
    %c1_17 = arith.constant 1 : index
    %45 = memref.load %arg2[%c1_17] : memref<8xf32, #tpu.memory_space<smem>>
    %46 = vector.broadcast %45 : f32 to vector<1x128xf32>
    %47 = arith.addf %44, %46 : vector<1x128xf32>
    %cst_18 = arith.constant 5.000000e-01 : f32
    %48 = vector.broadcast %cst_18 : f32 to vector<1x128xf32>
    %49 = arith.mulf %48, %47 : vector<1x128xf32>
    %50 = math.tanh %49 : vector<1x128xf32>
    %cst_19 = arith.constant 5.000000e-01 : f32
    %51 = vector.broadcast %cst_19 : f32 to vector<1x128xf32>
    %52 = arith.mulf %51, %50 : vector<1x128xf32>
    %cst_20 = arith.constant 5.000000e-01 : f32
    %53 = vector.broadcast %cst_20 : f32 to vector<1x128xf32>
    %54 = arith.addf %52, %53 : vector<1x128xf32>
    %c0_21 = arith.constant 0 : index
    %c2_22 = arith.constant 2 : index
    %55 = memref.load %arg1[%c0_21, %c2_22] : memref<4x8xf32, #tpu.memory_space<smem>>
    %56 = vector.broadcast %55 : f32 to vector<1x128xf32>
    %57 = arith.mulf %1, %56 : vector<1x128xf32>
    %c1_23 = arith.constant 1 : index
    %c2_24 = arith.constant 2 : index
    %58 = memref.load %arg1[%c1_23, %c2_24] : memref<4x8xf32, #tpu.memory_space<smem>>
    %59 = vector.broadcast %58 : f32 to vector<1x128xf32>
    %60 = arith.mulf %2, %59 : vector<1x128xf32>
    %61 = arith.addf %57, %60 : vector<1x128xf32>
    %c2_25 = arith.constant 2 : index
    %c2_26 = arith.constant 2 : index
    %62 = memref.load %arg1[%c2_25, %c2_26] : memref<4x8xf32, #tpu.memory_space<smem>>
    %63 = vector.broadcast %62 : f32 to vector<1x128xf32>
    %64 = arith.mulf %3, %63 : vector<1x128xf32>
    %65 = arith.addf %61, %64 : vector<1x128xf32>
    %c3_27 = arith.constant 3 : index
    %c2_28 = arith.constant 2 : index
    %66 = memref.load %arg1[%c3_27, %c2_28] : memref<4x8xf32, #tpu.memory_space<smem>>
    %67 = vector.broadcast %66 : f32 to vector<1x128xf32>
    %68 = arith.mulf %4, %67 : vector<1x128xf32>
    %69 = arith.addf %65, %68 : vector<1x128xf32>
    %c2_29 = arith.constant 2 : index
    %70 = memref.load %arg2[%c2_29] : memref<8xf32, #tpu.memory_space<smem>>
    %71 = vector.broadcast %70 : f32 to vector<1x128xf32>
    %72 = arith.addf %69, %71 : vector<1x128xf32>
    %cst_30 = arith.constant 5.000000e-01 : f32
    %73 = vector.broadcast %cst_30 : f32 to vector<1x128xf32>
    %74 = arith.mulf %73, %72 : vector<1x128xf32>
    %75 = math.tanh %74 : vector<1x128xf32>
    %cst_31 = arith.constant 5.000000e-01 : f32
    %76 = vector.broadcast %cst_31 : f32 to vector<1x128xf32>
    %77 = arith.mulf %76, %75 : vector<1x128xf32>
    %cst_32 = arith.constant 5.000000e-01 : f32
    %78 = vector.broadcast %cst_32 : f32 to vector<1x128xf32>
    %79 = arith.addf %77, %78 : vector<1x128xf32>
    %c0_33 = arith.constant 0 : index
    %c3_34 = arith.constant 3 : index
    %80 = memref.load %arg1[%c0_33, %c3_34] : memref<4x8xf32, #tpu.memory_space<smem>>
    %81 = vector.broadcast %80 : f32 to vector<1x128xf32>
    %82 = arith.mulf %1, %81 : vector<1x128xf32>
    %c1_35 = arith.constant 1 : index
    %c3_36 = arith.constant 3 : index
    %83 = memref.load %arg1[%c1_35, %c3_36] : memref<4x8xf32, #tpu.memory_space<smem>>
    %84 = vector.broadcast %83 : f32 to vector<1x128xf32>
    %85 = arith.mulf %2, %84 : vector<1x128xf32>
    %86 = arith.addf %82, %85 : vector<1x128xf32>
    %c2_37 = arith.constant 2 : index
    %c3_38 = arith.constant 3 : index
    %87 = memref.load %arg1[%c2_37, %c3_38] : memref<4x8xf32, #tpu.memory_space<smem>>
    %88 = vector.broadcast %87 : f32 to vector<1x128xf32>
    %89 = arith.mulf %3, %88 : vector<1x128xf32>
    %90 = arith.addf %86, %89 : vector<1x128xf32>
    %c3_39 = arith.constant 3 : index
    %c3_40 = arith.constant 3 : index
    %91 = memref.load %arg1[%c3_39, %c3_40] : memref<4x8xf32, #tpu.memory_space<smem>>
    %92 = vector.broadcast %91 : f32 to vector<1x128xf32>
    %93 = arith.mulf %4, %92 : vector<1x128xf32>
    %94 = arith.addf %90, %93 : vector<1x128xf32>
    %c3_41 = arith.constant 3 : index
    %95 = memref.load %arg2[%c3_41] : memref<8xf32, #tpu.memory_space<smem>>
    %96 = vector.broadcast %95 : f32 to vector<1x128xf32>
    %97 = arith.addf %94, %96 : vector<1x128xf32>
    %cst_42 = arith.constant 5.000000e-01 : f32
    %98 = vector.broadcast %cst_42 : f32 to vector<1x128xf32>
    %99 = arith.mulf %98, %97 : vector<1x128xf32>
    %100 = math.tanh %99 : vector<1x128xf32>
    %cst_43 = arith.constant 5.000000e-01 : f32
    %101 = vector.broadcast %cst_43 : f32 to vector<1x128xf32>
    %102 = arith.mulf %101, %100 : vector<1x128xf32>
    %cst_44 = arith.constant 5.000000e-01 : f32
    %103 = vector.broadcast %cst_44 : f32 to vector<1x128xf32>
    %104 = arith.addf %102, %103 : vector<1x128xf32>
    %c0_45 = arith.constant 0 : index
    %c4 = arith.constant 4 : index
    %105 = memref.load %arg1[%c0_45, %c4] : memref<4x8xf32, #tpu.memory_space<smem>>
    %106 = vector.broadcast %105 : f32 to vector<1x128xf32>
    %107 = arith.mulf %1, %106 : vector<1x128xf32>
    %c1_46 = arith.constant 1 : index
    %c4_47 = arith.constant 4 : index
    %108 = memref.load %arg1[%c1_46, %c4_47] : memref<4x8xf32, #tpu.memory_space<smem>>
    %109 = vector.broadcast %108 : f32 to vector<1x128xf32>
    %110 = arith.mulf %2, %109 : vector<1x128xf32>
    %111 = arith.addf %107, %110 : vector<1x128xf32>
    %c2_48 = arith.constant 2 : index
    %c4_49 = arith.constant 4 : index
    %112 = memref.load %arg1[%c2_48, %c4_49] : memref<4x8xf32, #tpu.memory_space<smem>>
    %113 = vector.broadcast %112 : f32 to vector<1x128xf32>
    %114 = arith.mulf %3, %113 : vector<1x128xf32>
    %115 = arith.addf %111, %114 : vector<1x128xf32>
    %c3_50 = arith.constant 3 : index
    %c4_51 = arith.constant 4 : index
    %116 = memref.load %arg1[%c3_50, %c4_51] : memref<4x8xf32, #tpu.memory_space<smem>>
    %117 = vector.broadcast %116 : f32 to vector<1x128xf32>
    %118 = arith.mulf %4, %117 : vector<1x128xf32>
    %119 = arith.addf %115, %118 : vector<1x128xf32>
    %c4_52 = arith.constant 4 : index
    %120 = memref.load %arg2[%c4_52] : memref<8xf32, #tpu.memory_space<smem>>
    %121 = vector.broadcast %120 : f32 to vector<1x128xf32>
    %122 = arith.addf %119, %121 : vector<1x128xf32>
    %cst_53 = arith.constant 5.000000e-01 : f32
    %123 = vector.broadcast %cst_53 : f32 to vector<1x128xf32>
    %124 = arith.mulf %123, %122 : vector<1x128xf32>
    %125 = math.tanh %124 : vector<1x128xf32>
    %cst_54 = arith.constant 5.000000e-01 : f32
    %126 = vector.broadcast %cst_54 : f32 to vector<1x128xf32>
    %127 = arith.mulf %126, %125 : vector<1x128xf32>
    %cst_55 = arith.constant 5.000000e-01 : f32
    %128 = vector.broadcast %cst_55 : f32 to vector<1x128xf32>
    %129 = arith.addf %127, %128 : vector<1x128xf32>
    %c0_56 = arith.constant 0 : index
    %c5 = arith.constant 5 : index
    %130 = memref.load %arg1[%c0_56, %c5] : memref<4x8xf32, #tpu.memory_space<smem>>
    %131 = vector.broadcast %130 : f32 to vector<1x128xf32>
    %132 = arith.mulf %1, %131 : vector<1x128xf32>
    %c1_57 = arith.constant 1 : index
    %c5_58 = arith.constant 5 : index
    %133 = memref.load %arg1[%c1_57, %c5_58] : memref<4x8xf32, #tpu.memory_space<smem>>
    %134 = vector.broadcast %133 : f32 to vector<1x128xf32>
    %135 = arith.mulf %2, %134 : vector<1x128xf32>
    %136 = arith.addf %132, %135 : vector<1x128xf32>
    %c2_59 = arith.constant 2 : index
    %c5_60 = arith.constant 5 : index
    %137 = memref.load %arg1[%c2_59, %c5_60] : memref<4x8xf32, #tpu.memory_space<smem>>
    %138 = vector.broadcast %137 : f32 to vector<1x128xf32>
    %139 = arith.mulf %3, %138 : vector<1x128xf32>
    %140 = arith.addf %136, %139 : vector<1x128xf32>
    %c3_61 = arith.constant 3 : index
    %c5_62 = arith.constant 5 : index
    %141 = memref.load %arg1[%c3_61, %c5_62] : memref<4x8xf32, #tpu.memory_space<smem>>
    %142 = vector.broadcast %141 : f32 to vector<1x128xf32>
    %143 = arith.mulf %4, %142 : vector<1x128xf32>
    %144 = arith.addf %140, %143 : vector<1x128xf32>
    %c5_63 = arith.constant 5 : index
    %145 = memref.load %arg2[%c5_63] : memref<8xf32, #tpu.memory_space<smem>>
    %146 = vector.broadcast %145 : f32 to vector<1x128xf32>
    %147 = arith.addf %144, %146 : vector<1x128xf32>
    %cst_64 = arith.constant 5.000000e-01 : f32
    %148 = vector.broadcast %cst_64 : f32 to vector<1x128xf32>
    %149 = arith.mulf %148, %147 : vector<1x128xf32>
    %150 = math.tanh %149 : vector<1x128xf32>
    %cst_65 = arith.constant 5.000000e-01 : f32
    %151 = vector.broadcast %cst_65 : f32 to vector<1x128xf32>
    %152 = arith.mulf %151, %150 : vector<1x128xf32>
    %cst_66 = arith.constant 5.000000e-01 : f32
    %153 = vector.broadcast %cst_66 : f32 to vector<1x128xf32>
    %154 = arith.addf %152, %153 : vector<1x128xf32>
    %c0_67 = arith.constant 0 : index
    %c6 = arith.constant 6 : index
    %155 = memref.load %arg1[%c0_67, %c6] : memref<4x8xf32, #tpu.memory_space<smem>>
    %156 = vector.broadcast %155 : f32 to vector<1x128xf32>
    %157 = arith.mulf %1, %156 : vector<1x128xf32>
    %c1_68 = arith.constant 1 : index
    %c6_69 = arith.constant 6 : index
    %158 = memref.load %arg1[%c1_68, %c6_69] : memref<4x8xf32, #tpu.memory_space<smem>>
    %159 = vector.broadcast %158 : f32 to vector<1x128xf32>
    %160 = arith.mulf %2, %159 : vector<1x128xf32>
    %161 = arith.addf %157, %160 : vector<1x128xf32>
    %c2_70 = arith.constant 2 : index
    %c6_71 = arith.constant 6 : index
    %162 = memref.load %arg1[%c2_70, %c6_71] : memref<4x8xf32, #tpu.memory_space<smem>>
    %163 = vector.broadcast %162 : f32 to vector<1x128xf32>
    %164 = arith.mulf %3, %163 : vector<1x128xf32>
    %165 = arith.addf %161, %164 : vector<1x128xf32>
    %c3_72 = arith.constant 3 : index
    %c6_73 = arith.constant 6 : index
    %166 = memref.load %arg1[%c3_72, %c6_73] : memref<4x8xf32, #tpu.memory_space<smem>>
    %167 = vector.broadcast %166 : f32 to vector<1x128xf32>
    %168 = arith.mulf %4, %167 : vector<1x128xf32>
    %169 = arith.addf %165, %168 : vector<1x128xf32>
    %c6_74 = arith.constant 6 : index
    %170 = memref.load %arg2[%c6_74] : memref<8xf32, #tpu.memory_space<smem>>
    %171 = vector.broadcast %170 : f32 to vector<1x128xf32>
    %172 = arith.addf %169, %171 : vector<1x128xf32>
    %cst_75 = arith.constant 5.000000e-01 : f32
    %173 = vector.broadcast %cst_75 : f32 to vector<1x128xf32>
    %174 = arith.mulf %173, %172 : vector<1x128xf32>
    %175 = math.tanh %174 : vector<1x128xf32>
    %cst_76 = arith.constant 5.000000e-01 : f32
    %176 = vector.broadcast %cst_76 : f32 to vector<1x128xf32>
    %177 = arith.mulf %176, %175 : vector<1x128xf32>
    %cst_77 = arith.constant 5.000000e-01 : f32
    %178 = vector.broadcast %cst_77 : f32 to vector<1x128xf32>
    %179 = arith.addf %177, %178 : vector<1x128xf32>
    %c0_78 = arith.constant 0 : index
    %c7 = arith.constant 7 : index
    %180 = memref.load %arg1[%c0_78, %c7] : memref<4x8xf32, #tpu.memory_space<smem>>
    %181 = vector.broadcast %180 : f32 to vector<1x128xf32>
    %182 = arith.mulf %1, %181 : vector<1x128xf32>
    %c1_79 = arith.constant 1 : index
    %c7_80 = arith.constant 7 : index
    %183 = memref.load %arg1[%c1_79, %c7_80] : memref<4x8xf32, #tpu.memory_space<smem>>
    %184 = vector.broadcast %183 : f32 to vector<1x128xf32>
    %185 = arith.mulf %2, %184 : vector<1x128xf32>
    %186 = arith.addf %182, %185 : vector<1x128xf32>
    %c2_81 = arith.constant 2 : index
    %c7_82 = arith.constant 7 : index
    %187 = memref.load %arg1[%c2_81, %c7_82] : memref<4x8xf32, #tpu.memory_space<smem>>
    %188 = vector.broadcast %187 : f32 to vector<1x128xf32>
    %189 = arith.mulf %3, %188 : vector<1x128xf32>
    %190 = arith.addf %186, %189 : vector<1x128xf32>
    %c3_83 = arith.constant 3 : index
    %c7_84 = arith.constant 7 : index
    %191 = memref.load %arg1[%c3_83, %c7_84] : memref<4x8xf32, #tpu.memory_space<smem>>
    %192 = vector.broadcast %191 : f32 to vector<1x128xf32>
    %193 = arith.mulf %4, %192 : vector<1x128xf32>
    %194 = arith.addf %190, %193 : vector<1x128xf32>
    %c7_85 = arith.constant 7 : index
    %195 = memref.load %arg2[%c7_85] : memref<8xf32, #tpu.memory_space<smem>>
    %196 = vector.broadcast %195 : f32 to vector<1x128xf32>
    %197 = arith.addf %194, %196 : vector<1x128xf32>
    %cst_86 = arith.constant 5.000000e-01 : f32
    %198 = vector.broadcast %cst_86 : f32 to vector<1x128xf32>
    %199 = arith.mulf %198, %197 : vector<1x128xf32>
    %200 = math.tanh %199 : vector<1x128xf32>
    %cst_87 = arith.constant 5.000000e-01 : f32
    %201 = vector.broadcast %cst_87 : f32 to vector<1x128xf32>
    %202 = arith.mulf %201, %200 : vector<1x128xf32>
    %cst_88 = arith.constant 5.000000e-01 : f32
    %203 = vector.broadcast %cst_88 : f32 to vector<1x128xf32>
    %204 = arith.addf %202, %203 : vector<1x128xf32>
    %c0_89 = arith.constant 0 : index
    %c0_90 = arith.constant 0 : index
    %205 = memref.load %arg3[%c0_89, %c0_90] : memref<8x4xf32, #tpu.memory_space<smem>>
    %206 = vector.broadcast %205 : f32 to vector<1x128xf32>
    %207 = arith.mulf %29, %206 : vector<1x128xf32>
    %c1_91 = arith.constant 1 : index
    %c0_92 = arith.constant 0 : index
    %208 = memref.load %arg3[%c1_91, %c0_92] : memref<8x4xf32, #tpu.memory_space<smem>>
    %209 = vector.broadcast %208 : f32 to vector<1x128xf32>
    %210 = arith.mulf %54, %209 : vector<1x128xf32>
    %211 = arith.addf %207, %210 : vector<1x128xf32>
    %c2_93 = arith.constant 2 : index
    %c0_94 = arith.constant 0 : index
    %212 = memref.load %arg3[%c2_93, %c0_94] : memref<8x4xf32, #tpu.memory_space<smem>>
    %213 = vector.broadcast %212 : f32 to vector<1x128xf32>
    %214 = arith.mulf %79, %213 : vector<1x128xf32>
    %215 = arith.addf %211, %214 : vector<1x128xf32>
    %c3_95 = arith.constant 3 : index
    %c0_96 = arith.constant 0 : index
    %216 = memref.load %arg3[%c3_95, %c0_96] : memref<8x4xf32, #tpu.memory_space<smem>>
    %217 = vector.broadcast %216 : f32 to vector<1x128xf32>
    %218 = arith.mulf %104, %217 : vector<1x128xf32>
    %219 = arith.addf %215, %218 : vector<1x128xf32>
    %c4_97 = arith.constant 4 : index
    %c0_98 = arith.constant 0 : index
    %220 = memref.load %arg3[%c4_97, %c0_98] : memref<8x4xf32, #tpu.memory_space<smem>>
    %221 = vector.broadcast %220 : f32 to vector<1x128xf32>
    %222 = arith.mulf %129, %221 : vector<1x128xf32>
    %223 = arith.addf %219, %222 : vector<1x128xf32>
    %c5_99 = arith.constant 5 : index
    %c0_100 = arith.constant 0 : index
    %224 = memref.load %arg3[%c5_99, %c0_100] : memref<8x4xf32, #tpu.memory_space<smem>>
    %225 = vector.broadcast %224 : f32 to vector<1x128xf32>
    %226 = arith.mulf %154, %225 : vector<1x128xf32>
    %227 = arith.addf %223, %226 : vector<1x128xf32>
    %c6_101 = arith.constant 6 : index
    %c0_102 = arith.constant 0 : index
    %228 = memref.load %arg3[%c6_101, %c0_102] : memref<8x4xf32, #tpu.memory_space<smem>>
    %229 = vector.broadcast %228 : f32 to vector<1x128xf32>
    %230 = arith.mulf %179, %229 : vector<1x128xf32>
    %231 = arith.addf %227, %230 : vector<1x128xf32>
    %c7_103 = arith.constant 7 : index
    %c0_104 = arith.constant 0 : index
    %232 = memref.load %arg3[%c7_103, %c0_104] : memref<8x4xf32, #tpu.memory_space<smem>>
    %233 = vector.broadcast %232 : f32 to vector<1x128xf32>
    %234 = arith.mulf %204, %233 : vector<1x128xf32>
    %235 = arith.addf %231, %234 : vector<1x128xf32>
    %c0_105 = arith.constant 0 : index
    %236 = memref.load %arg4[%c0_105] : memref<4xf32, #tpu.memory_space<smem>>
    %237 = vector.broadcast %236 : f32 to vector<1x128xf32>
    %238 = arith.addf %235, %237 : vector<1x128xf32>
    %cst_106 = arith.constant 5.000000e-01 : f32
    %239 = vector.broadcast %cst_106 : f32 to vector<1x128xf32>
    %240 = arith.mulf %239, %238 : vector<1x128xf32>
    %241 = math.tanh %240 : vector<1x128xf32>
    %cst_107 = arith.constant 5.000000e-01 : f32
    %242 = vector.broadcast %cst_107 : f32 to vector<1x128xf32>
    %243 = arith.mulf %242, %241 : vector<1x128xf32>
    %cst_108 = arith.constant 5.000000e-01 : f32
    %244 = vector.broadcast %cst_108 : f32 to vector<1x128xf32>
    %245 = arith.addf %243, %244 : vector<1x128xf32>
    %c0_109 = arith.constant 0 : index
    %c1_110 = arith.constant 1 : index
    %246 = memref.load %arg3[%c0_109, %c1_110] : memref<8x4xf32, #tpu.memory_space<smem>>
    %247 = vector.broadcast %246 : f32 to vector<1x128xf32>
    %248 = arith.mulf %29, %247 : vector<1x128xf32>
    %c1_111 = arith.constant 1 : index
    %c1_112 = arith.constant 1 : index
    %249 = memref.load %arg3[%c1_111, %c1_112] : memref<8x4xf32, #tpu.memory_space<smem>>
    %250 = vector.broadcast %249 : f32 to vector<1x128xf32>
    %251 = arith.mulf %54, %250 : vector<1x128xf32>
    %252 = arith.addf %248, %251 : vector<1x128xf32>
    %c2_113 = arith.constant 2 : index
    %c1_114 = arith.constant 1 : index
    %253 = memref.load %arg3[%c2_113, %c1_114] : memref<8x4xf32, #tpu.memory_space<smem>>
    %254 = vector.broadcast %253 : f32 to vector<1x128xf32>
    %255 = arith.mulf %79, %254 : vector<1x128xf32>
    %256 = arith.addf %252, %255 : vector<1x128xf32>
    %c3_115 = arith.constant 3 : index
    %c1_116 = arith.constant 1 : index
    %257 = memref.load %arg3[%c3_115, %c1_116] : memref<8x4xf32, #tpu.memory_space<smem>>
    %258 = vector.broadcast %257 : f32 to vector<1x128xf32>
    %259 = arith.mulf %104, %258 : vector<1x128xf32>
    %260 = arith.addf %256, %259 : vector<1x128xf32>
    %c4_117 = arith.constant 4 : index
    %c1_118 = arith.constant 1 : index
    %261 = memref.load %arg3[%c4_117, %c1_118] : memref<8x4xf32, #tpu.memory_space<smem>>
    %262 = vector.broadcast %261 : f32 to vector<1x128xf32>
    %263 = arith.mulf %129, %262 : vector<1x128xf32>
    %264 = arith.addf %260, %263 : vector<1x128xf32>
    %c5_119 = arith.constant 5 : index
    %c1_120 = arith.constant 1 : index
    %265 = memref.load %arg3[%c5_119, %c1_120] : memref<8x4xf32, #tpu.memory_space<smem>>
    %266 = vector.broadcast %265 : f32 to vector<1x128xf32>
    %267 = arith.mulf %154, %266 : vector<1x128xf32>
    %268 = arith.addf %264, %267 : vector<1x128xf32>
    %c6_121 = arith.constant 6 : index
    %c1_122 = arith.constant 1 : index
    %269 = memref.load %arg3[%c6_121, %c1_122] : memref<8x4xf32, #tpu.memory_space<smem>>
    %270 = vector.broadcast %269 : f32 to vector<1x128xf32>
    %271 = arith.mulf %179, %270 : vector<1x128xf32>
    %272 = arith.addf %268, %271 : vector<1x128xf32>
    %c7_123 = arith.constant 7 : index
    %c1_124 = arith.constant 1 : index
    %273 = memref.load %arg3[%c7_123, %c1_124] : memref<8x4xf32, #tpu.memory_space<smem>>
    %274 = vector.broadcast %273 : f32 to vector<1x128xf32>
    %275 = arith.mulf %204, %274 : vector<1x128xf32>
    %276 = arith.addf %272, %275 : vector<1x128xf32>
    %c1_125 = arith.constant 1 : index
    %277 = memref.load %arg4[%c1_125] : memref<4xf32, #tpu.memory_space<smem>>
    %278 = vector.broadcast %277 : f32 to vector<1x128xf32>
    %279 = arith.addf %276, %278 : vector<1x128xf32>
    %cst_126 = arith.constant 5.000000e-01 : f32
    %280 = vector.broadcast %cst_126 : f32 to vector<1x128xf32>
    %281 = arith.mulf %280, %279 : vector<1x128xf32>
    %282 = math.tanh %281 : vector<1x128xf32>
    %cst_127 = arith.constant 5.000000e-01 : f32
    %283 = vector.broadcast %cst_127 : f32 to vector<1x128xf32>
    %284 = arith.mulf %283, %282 : vector<1x128xf32>
    %cst_128 = arith.constant 5.000000e-01 : f32
    %285 = vector.broadcast %cst_128 : f32 to vector<1x128xf32>
    %286 = arith.addf %284, %285 : vector<1x128xf32>
    %c0_129 = arith.constant 0 : index
    %c2_130 = arith.constant 2 : index
    %287 = memref.load %arg3[%c0_129, %c2_130] : memref<8x4xf32, #tpu.memory_space<smem>>
    %288 = vector.broadcast %287 : f32 to vector<1x128xf32>
    %289 = arith.mulf %29, %288 : vector<1x128xf32>
    %c1_131 = arith.constant 1 : index
    %c2_132 = arith.constant 2 : index
    %290 = memref.load %arg3[%c1_131, %c2_132] : memref<8x4xf32, #tpu.memory_space<smem>>
    %291 = vector.broadcast %290 : f32 to vector<1x128xf32>
    %292 = arith.mulf %54, %291 : vector<1x128xf32>
    %293 = arith.addf %289, %292 : vector<1x128xf32>
    %c2_133 = arith.constant 2 : index
    %c2_134 = arith.constant 2 : index
    %294 = memref.load %arg3[%c2_133, %c2_134] : memref<8x4xf32, #tpu.memory_space<smem>>
    %295 = vector.broadcast %294 : f32 to vector<1x128xf32>
    %296 = arith.mulf %79, %295 : vector<1x128xf32>
    %297 = arith.addf %293, %296 : vector<1x128xf32>
    %c3_135 = arith.constant 3 : index
    %c2_136 = arith.constant 2 : index
    %298 = memref.load %arg3[%c3_135, %c2_136] : memref<8x4xf32, #tpu.memory_space<smem>>
    %299 = vector.broadcast %298 : f32 to vector<1x128xf32>
    %300 = arith.mulf %104, %299 : vector<1x128xf32>
    %301 = arith.addf %297, %300 : vector<1x128xf32>
    %c4_137 = arith.constant 4 : index
    %c2_138 = arith.constant 2 : index
    %302 = memref.load %arg3[%c4_137, %c2_138] : memref<8x4xf32, #tpu.memory_space<smem>>
    %303 = vector.broadcast %302 : f32 to vector<1x128xf32>
    %304 = arith.mulf %129, %303 : vector<1x128xf32>
    %305 = arith.addf %301, %304 : vector<1x128xf32>
    %c5_139 = arith.constant 5 : index
    %c2_140 = arith.constant 2 : index
    %306 = memref.load %arg3[%c5_139, %c2_140] : memref<8x4xf32, #tpu.memory_space<smem>>
    %307 = vector.broadcast %306 : f32 to vector<1x128xf32>
    %308 = arith.mulf %154, %307 : vector<1x128xf32>
    %309 = arith.addf %305, %308 : vector<1x128xf32>
    %c6_141 = arith.constant 6 : index
    %c2_142 = arith.constant 2 : index
    %310 = memref.load %arg3[%c6_141, %c2_142] : memref<8x4xf32, #tpu.memory_space<smem>>
    %311 = vector.broadcast %310 : f32 to vector<1x128xf32>
    %312 = arith.mulf %179, %311 : vector<1x128xf32>
    %313 = arith.addf %309, %312 : vector<1x128xf32>
    %c7_143 = arith.constant 7 : index
    %c2_144 = arith.constant 2 : index
    %314 = memref.load %arg3[%c7_143, %c2_144] : memref<8x4xf32, #tpu.memory_space<smem>>
    %315 = vector.broadcast %314 : f32 to vector<1x128xf32>
    %316 = arith.mulf %204, %315 : vector<1x128xf32>
    %317 = arith.addf %313, %316 : vector<1x128xf32>
    %c2_145 = arith.constant 2 : index
    %318 = memref.load %arg4[%c2_145] : memref<4xf32, #tpu.memory_space<smem>>
    %319 = vector.broadcast %318 : f32 to vector<1x128xf32>
    %320 = arith.addf %317, %319 : vector<1x128xf32>
    %cst_146 = arith.constant 5.000000e-01 : f32
    %321 = vector.broadcast %cst_146 : f32 to vector<1x128xf32>
    %322 = arith.mulf %321, %320 : vector<1x128xf32>
    %323 = math.tanh %322 : vector<1x128xf32>
    %cst_147 = arith.constant 5.000000e-01 : f32
    %324 = vector.broadcast %cst_147 : f32 to vector<1x128xf32>
    %325 = arith.mulf %324, %323 : vector<1x128xf32>
    %cst_148 = arith.constant 5.000000e-01 : f32
    %326 = vector.broadcast %cst_148 : f32 to vector<1x128xf32>
    %327 = arith.addf %325, %326 : vector<1x128xf32>
    %c0_149 = arith.constant 0 : index
    %c3_150 = arith.constant 3 : index
    %328 = memref.load %arg3[%c0_149, %c3_150] : memref<8x4xf32, #tpu.memory_space<smem>>
    %329 = vector.broadcast %328 : f32 to vector<1x128xf32>
    %330 = arith.mulf %29, %329 : vector<1x128xf32>
    %c1_151 = arith.constant 1 : index
    %c3_152 = arith.constant 3 : index
    %331 = memref.load %arg3[%c1_151, %c3_152] : memref<8x4xf32, #tpu.memory_space<smem>>
    %332 = vector.broadcast %331 : f32 to vector<1x128xf32>
    %333 = arith.mulf %54, %332 : vector<1x128xf32>
    %334 = arith.addf %330, %333 : vector<1x128xf32>
    %c2_153 = arith.constant 2 : index
    %c3_154 = arith.constant 3 : index
    %335 = memref.load %arg3[%c2_153, %c3_154] : memref<8x4xf32, #tpu.memory_space<smem>>
    %336 = vector.broadcast %335 : f32 to vector<1x128xf32>
    %337 = arith.mulf %79, %336 : vector<1x128xf32>
    %338 = arith.addf %334, %337 : vector<1x128xf32>
    %c3_155 = arith.constant 3 : index
    %c3_156 = arith.constant 3 : index
    %339 = memref.load %arg3[%c3_155, %c3_156] : memref<8x4xf32, #tpu.memory_space<smem>>
    %340 = vector.broadcast %339 : f32 to vector<1x128xf32>
    %341 = arith.mulf %104, %340 : vector<1x128xf32>
    %342 = arith.addf %338, %341 : vector<1x128xf32>
    %c4_157 = arith.constant 4 : index
    %c3_158 = arith.constant 3 : index
    %343 = memref.load %arg3[%c4_157, %c3_158] : memref<8x4xf32, #tpu.memory_space<smem>>
    %344 = vector.broadcast %343 : f32 to vector<1x128xf32>
    %345 = arith.mulf %129, %344 : vector<1x128xf32>
    %346 = arith.addf %342, %345 : vector<1x128xf32>
    %c5_159 = arith.constant 5 : index
    %c3_160 = arith.constant 3 : index
    %347 = memref.load %arg3[%c5_159, %c3_160] : memref<8x4xf32, #tpu.memory_space<smem>>
    %348 = vector.broadcast %347 : f32 to vector<1x128xf32>
    %349 = arith.mulf %154, %348 : vector<1x128xf32>
    %350 = arith.addf %346, %349 : vector<1x128xf32>
    %c6_161 = arith.constant 6 : index
    %c3_162 = arith.constant 3 : index
    %351 = memref.load %arg3[%c6_161, %c3_162] : memref<8x4xf32, #tpu.memory_space<smem>>
    %352 = vector.broadcast %351 : f32 to vector<1x128xf32>
    %353 = arith.mulf %179, %352 : vector<1x128xf32>
    %354 = arith.addf %350, %353 : vector<1x128xf32>
    %c7_163 = arith.constant 7 : index
    %c3_164 = arith.constant 3 : index
    %355 = memref.load %arg3[%c7_163, %c3_164] : memref<8x4xf32, #tpu.memory_space<smem>>
    %356 = vector.broadcast %355 : f32 to vector<1x128xf32>
    %357 = arith.mulf %204, %356 : vector<1x128xf32>
    %358 = arith.addf %354, %357 : vector<1x128xf32>
    %c3_165 = arith.constant 3 : index
    %359 = memref.load %arg4[%c3_165] : memref<4xf32, #tpu.memory_space<smem>>
    %360 = vector.broadcast %359 : f32 to vector<1x128xf32>
    %361 = arith.addf %358, %360 : vector<1x128xf32>
    %cst_166 = arith.constant 5.000000e-01 : f32
    %362 = vector.broadcast %cst_166 : f32 to vector<1x128xf32>
    %363 = arith.mulf %362, %361 : vector<1x128xf32>
    %364 = math.tanh %363 : vector<1x128xf32>
    %cst_167 = arith.constant 5.000000e-01 : f32
    %365 = vector.broadcast %cst_167 : f32 to vector<1x128xf32>
    %366 = arith.mulf %365, %364 : vector<1x128xf32>
    %cst_168 = arith.constant 5.000000e-01 : f32
    %367 = vector.broadcast %cst_168 : f32 to vector<1x128xf32>
    %368 = arith.addf %366, %367 : vector<1x128xf32>
    %c0_169 = arith.constant 0 : index
    %c0_170 = arith.constant 0 : index
    %369 = memref.load %arg5[%c0_169, %c0_170] : memref<4x1xf32, #tpu.memory_space<smem>>
    %370 = vector.broadcast %369 : f32 to vector<1x128xf32>
    %371 = arith.mulf %245, %370 : vector<1x128xf32>
    %c1_171 = arith.constant 1 : index
    %c0_172 = arith.constant 0 : index
    %372 = memref.load %arg5[%c1_171, %c0_172] : memref<4x1xf32, #tpu.memory_space<smem>>
    %373 = vector.broadcast %372 : f32 to vector<1x128xf32>
    %374 = arith.mulf %286, %373 : vector<1x128xf32>
    %375 = arith.addf %371, %374 : vector<1x128xf32>
    %c2_173 = arith.constant 2 : index
    %c0_174 = arith.constant 0 : index
    %376 = memref.load %arg5[%c2_173, %c0_174] : memref<4x1xf32, #tpu.memory_space<smem>>
    %377 = vector.broadcast %376 : f32 to vector<1x128xf32>
    %378 = arith.mulf %327, %377 : vector<1x128xf32>
    %379 = arith.addf %375, %378 : vector<1x128xf32>
    %c3_175 = arith.constant 3 : index
    %c0_176 = arith.constant 0 : index
    %380 = memref.load %arg5[%c3_175, %c0_176] : memref<4x1xf32, #tpu.memory_space<smem>>
    %381 = vector.broadcast %380 : f32 to vector<1x128xf32>
    %382 = arith.mulf %368, %381 : vector<1x128xf32>
    %383 = arith.addf %379, %382 : vector<1x128xf32>
    %c0_177 = arith.constant 0 : index
    %384 = memref.load %arg6[%c0_177] : memref<1xf32, #tpu.memory_space<smem>>
    %385 = vector.broadcast %384 : f32 to vector<1x128xf32>
    %386 = arith.addf %383, %385 : vector<1x128xf32>
    %cst_178 = arith.constant 5.000000e-01 : f32
    %387 = vector.broadcast %cst_178 : f32 to vector<1x128xf32>
    %388 = arith.mulf %387, %386 : vector<1x128xf32>
    %389 = math.tanh %388 : vector<1x128xf32>
    %cst_179 = arith.constant 5.000000e-01 : f32
    %390 = vector.broadcast %cst_179 : f32 to vector<1x128xf32>
    %391 = arith.mulf %390, %389 : vector<1x128xf32>
    %cst_180 = arith.constant 5.000000e-01 : f32
    %392 = vector.broadcast %cst_180 : f32 to vector<1x128xf32>
    %393 = arith.addf %391, %392 : vector<1x128xf32>
    %c0_181 = arith.constant 0 : index
    %c0_182 = arith.constant 0 : index
    %394 = vector.load %arg8[%c0_181, %c0_182] : memref<1x128xf32, #tpu.memory_space<vmem>>, vector<1x128xf32>
    tpu.vector_store %arg8[%c0_181, %c0_182], %393 {strides = array<i32>} : memref<1x128xf32, #tpu.memory_space<vmem>>, vector<1x128xf32>,
    return
  }
  func.func @transform_0(%arg0: i32) -> (i32, i32) {
    %c0_i32 = arith.constant 0 : i32
    %c0_i32_0 = arith.constant 0 : i32
    %c0_i32_1 = arith.constant 0 : i32
    return %c0_i32, %c0_i32_0 : i32, i32
  }
  func.func @transform_1(%arg0: i32) -> i32 {
    %c0_i32 = arith.constant 0 : i32
    %c0_i32_0 = arith.constant 0 : i32
    return %c0_i32 : i32
  }
  func.func @transform_2(%arg0: i32) -> (i32, i32) {
    %c0_i32 = arith.constant 0 : i32
    %c0_i32_0 = arith.constant 0 : i32
    %c0_i32_1 = arith.constant 0 : i32
    return %c0_i32, %c0_i32_0 : i32, i32
  }
  func.func @transform_3(%arg0: i32) -> i32 {
    %c0_i32 = arith.constant 0 : i32
    %c0_i32_0 = arith.constant 0 : i32
    return %c0_i32 : i32
  }
  func.func @transform_4(%arg0: i32) -> (i32, i32) {
    %c0_i32 = arith.constant 0 : i32
    %c0_i32_0 = arith.constant 0 : i32
    %c0_i32_1 = arith.constant 0 : i32
    return %c0_i32, %c0_i32_0 : i32, i32
  }
  func.func @transform_5(%arg0: i32) -> i32 {
    %c0_i32 = arith.constant 0 : i32
    %c0_i32_0 = arith.constant 0 : i32
    return %c0_i32 : i32
  }
  func.func @transform_6(%arg0: i32) -> (i32, i32) {
    %c0_i32 = arith.constant 0 : i32
    %c0_i32_0 = arith.constant 0 : i32
    return %c0_i32, %arg0 : i32, i32
  }
  func.func @transform_7(%arg0: i32) -> (i32, i32) {
    %c0_i32 = arith.constant 0 : i32
    %c0_i32_0 = arith.constant 0 : i32
    return %c0_i32, %arg0 : i32, i32
  }
}

</mosaic_0001>

<llo_original>
// kernel: mlp_forward.1
$region0: #{mlp_forward.1}
  #allocation0 [shape = 'u32[]', space=smem, size = 0x4, offset = 0x4, fixed_abs, tag = 'smem constant byte address 0x4 - core index']
  #allocation1 [shape = 'u32[144,128]{1,0:T(1,128)}', space=vmem, size = 0x12000, scoped, tag = 'internal scratch']
  #allocation2 [shape = 'f32[1]{0:T(128)S(6)}', space=smem, size = 0x200, scoped, tag = 'scoped memory for mlp_forward.1']
  %s0 = inlined_call_operand.hbm [shape: f32[4,8], index: 0, kind: input, shape index: {}]
  %s1 = inlined_call_operand.hbm [shape: f32[8], index: 1, kind: input, shape index: {}]
  %s2 = inlined_call_operand.hbm [shape: f32[8,4], index: 2, kind: input, shape index: {}]
  %s3 = inlined_call_operand.hbm [shape: f32[4], index: 3, kind: input, shape index: {}]
  %s4 = inlined_call_operand.hbm [shape: f32[4,1], index: 4, kind: input, shape index: {}]
  %s5 = inlined_call_operand.<no memory space> [shape: f32[1], index: 5, kind: input, shape index: {}]
  %s6 = inlined_call_operand.hbm [shape: f32[4,384], index: 6, kind: input, shape index: {}]
  %s7 = inlined_call_operand.hbm [shape: f32[1,384], index: 7, kind: output, shape index: {}]
  %s8 = sld [smem:[#allocation0]]
  $region85: #{mlp_forward.1} parent=0
    _
  %s10 = ssub.s32 1, %s8
  %s11 = scalar_select 0, %s10, %s8
  %12 = sst [smem:[#allocation2]] %s5
  $region1: #{mlp_forward.1} parent=0
    #allocation3 [shape = 'u8[2048]{0}', space=smem, size = 0x800, scoped, tag = 'input window, operand 0, single buffered']
    #allocation4 [shape = 's32[2]{0}', space=sflag, size = 0x8, scoped, tag = 'scoped memory for mlp_forward.1']
    #allocation5 [shape = 's32[2]{0}', space=sflag, size = 0x8, scoped, tag = 'scoped memory for mlp_forward.1']
    #allocation6 [shape = 's32[2]{0}', space=sflag, size = 0x8, scoped, tag = 'scoped memory for mlp_forward.1']
    #allocation7 [shape = 'u8[512]{0}', space=smem, size = 0x200, scoped, tag = 'input window, operand 1, single buffered']
    #allocation8 [shape = 's32[1]{0}', space=sflag, size = 0x4, scoped, tag = 'scoped memory for mlp_forward.1']
    #allocation9 [shape = 'u8[4096]{0}', space=smem, size = 0x1000, scoped, tag = 'input window, operand 2, single buffered']
    #allocation10 [shape = 'u8[512]{0}', space=smem, size = 0x200, scoped, tag = 'input window, operand 3, single buffered']
    #allocation11 [shape = 's32[1]{0}', space=sflag, size = 0x4, scoped, tag = 'scoped memory for mlp_forward.1']
    #allocation12 [shape = 'u8[2048]{0}', space=smem, size = 0x800, scoped, tag = 'input window, operand 4, single buffered']
    #allocation13 [shape = 'u8[4096]{0}', space=vmem, size = 0x1000, scoped, tag = 'input window, operand 6']
    #allocation14 [shape = 'u8[1024]{0}', space=vmem, size = 0x400, scoped, tag = 'output window, operand 0']
    %13 = vsyncpa [#allocation6], 0
    %14 = vsyncpa [#allocation8], 0
    %15 = vsyncpa [#allocation11], 0
    %16 = vsyncpa [#allocation4], 0
    %s17 = scalar_lea.sflag [#allocation4], 1
    %18 = vsyncpa %s17, 0
    %19 = vsyncpa [#allocation5], 0
    %s20 = scalar_lea.sflag [#allocation5], 1
    %21 = vsyncpa %s20, 0
    loop: start=0, step=1, limit=5
    $region2: #{mlp_forward.1} parent=1 // loop_pre_header
      _
    $region3: #{mlp_forward.1} parent=1 // loop_header
      %s23 = sphi 0, %s27
      %p24 = scmp.ge.s32.totalorder %s23, 5
      %s31 = sphi 0, %s31
      %s33 = sphi 0, %s31
      %s34 = sphi 0, %s33
      %s48 = sphi 0, %s34
      %s52 = sphi 0, %s52
      %s54 = sphi 0, %s52
      %s55 = sphi 0, %s54
      %s69 = sphi 0, %s55
      %s73 = sphi 0, %s73
      %s75 = sphi 0, %s73
      %s76 = sphi 0, %s75
      %s90 = sphi 0, %s76
      %s94 = sphi 0, %s94
      %s96 = sphi 0, %s94
      %s97 = sphi 0, %s96
      %s111 = sphi 0, %s97
      %s115 = sphi 0, %s115
      %s117 = sphi 0, %s115
      %s118 = sphi 0, %s117
      %s132 = sphi 0, %s118
      %s136 = sphi 0, %s136
      %s138 = sphi 0, %s136
      %s139 = sphi 0, %s138
      %s153 = sphi 0, %s139
      %s159 = sphi 0, %s161
      %s162 = sphi 0, %s159
      %s163 = sphi 0, %s162
      %s179 = sphi 0, %s163
      %s185 = sphi 0, %s187
      %s188 = sphi 0, %s185
      %s189 = sphi 0, %s188
      %s205 = sphi 0, %s189
    $region4: #{mlp_forward.1} parent=1 // loop_header_branch
      %26 = sbr.rel (%p24) target = $region8
    $region5: #{mlp_forward.1} parent=1 // loop_body
      %s28 = ssub.s32 %s23, 1
      %s29 = ssub.s32 %s23, 2
      %s30 = sadd.s32 %s23, 1
      %s32 = sadd.s32 %s31, 1
      %p35 = scmp.eq.s32.totalorder %s23, 2
      %p36 = scmp.ne.s32.totalorder %s31, %s33
      %p37 = scmp.eq.s32.totalorder %s23, 0
      %p38 = por %p36, %p37
      %p39 = scmp.ne.s32.totalorder %s31, %s33
      %p40 = scmp.eq.s32.totalorder %s28, 2
      %p41 = por %p39, %p40
      %p42 = scmp.ne.s32.totalorder %s33, %s34
      %p43 = scmp.eq.s32.totalorder %s28, 0
      %p44 = por %p42, %p43
      %p45 = scmp.ne.s32.totalorder %s33, %s34
      %p46 = scmp.eq.s32.totalorder %s29, 2
      %p47 = por %p45, %p46
      %p49 = scmp.ne.s32.totalorder %s34, %s48
      %p50 = scmp.eq.s32.totalorder %s29, 0
      %p51 = por %p49, %p50
      %s53 = sadd.s32 %s52, 1
      %p56 = scmp.eq.s32.totalorder %s23, 2
      %p57 = scmp.ne.s32.totalorder %s52, %s54
      %p58 = scmp.eq.s32.totalorder %s23, 0
      %p59 = por %p57, %p58
      %p60 = scmp.ne.s32.totalorder %s52, %s54
      %p61 = scmp.eq.s32.totalorder %s28, 2
      %p62 = por %p60, %p61
      %p63 = scmp.ne.s32.totalorder %s54, %s55
      %p64 = scmp.eq.s32.totalorder %s28, 0
      %p65 = por %p63, %p64
      %p66 = scmp.ne.s32.totalorder %s54, %s55
      %p67 = scmp.eq.s32.totalorder %s29, 2
      %p68 = por %p66, %p67
      %p70 = scmp.ne.s32.totalorder %s55, %s69
      %p71 = scmp.eq.s32.totalorder %s29, 0
      %p72 = por %p70, %p71
      %s74 = sadd.s32 %s73, 1
      %p77 = scmp.eq.s32.totalorder %s23, 2
      %p78 = scmp.ne.s32.totalorder %s73, %s75
      %p79 = scmp.eq.s32.totalorder %s23, 0
      %p80 = por %p78, %p79
      %p81 = scmp.ne.s32.totalorder %s73, %s75
      %p82 = scmp.eq.s32.totalorder %s28, 2
      %p83 = por %p81, %p82
      %p84 = scmp.ne.s32.totalorder %s75, %s76
      %p85 = scmp.eq.s32.totalorder %s28, 0
      %p86 = por %p84, %p85
      %p87 = scmp.ne.s32.totalorder %s75, %s76
      %p88 = scmp.eq.s32.totalorder %s29, 2
      %p89 = por %p87, %p88
      %p91 = scmp.ne.s32.totalorder %s76, %s90
      %p92 = scmp.eq.s32.totalorder %s29, 0
      %p93 = por %p91, %p92
      %s95 = sadd.s32 %s94, 1
      %p98 = scmp.eq.s32.totalorder %s23, 2
      %p99 = scmp.ne.s32.totalorder %s94, %s96
      %p100 = scmp.eq.s32.totalorder %s23, 0
      %p101 = por %p99, %p100
      %p102 = scmp.ne.s32.totalorder %s94, %s96
      %p103 = scmp.eq.s32.totalorder %s28, 2
      %p104 = por %p102, %p103
      %p105 = scmp.ne.s32.totalorder %s96, %s97
      %p106 = scmp.eq.s32.totalorder %s28, 0
      %p107 = por %p105, %p106
      %p108 = scmp.ne.s32.totalorder %s96, %s97
      %p109 = scmp.eq.s32.totalorder %s29, 2
      %p110 = por %p108, %p109
      %p112 = scmp.ne.s32.totalorder %s97, %s111
      %p113 = scmp.eq.s32.totalorder %s29, 0
      %p114 = por %p112, %p113
      %s116 = sadd.s32 %s115, 1
      %p119 = scmp.eq.s32.totalorder %s23, 2
      %p120 = scmp.ne.s32.totalorder %s115, %s117
      %p121 = scmp.eq.s32.totalorder %s23, 0
      %p122 = por %p120, %p121
      %p123 = scmp.ne.s32.totalorder %s115, %s117
      %p124 = scmp.eq.s32.totalorder %s28, 2
      %p125 = por %p123, %p124
      %p126 = scmp.ne.s32.totalorder %s117, %s118
      %p127 = scmp.eq.s32.totalorder %s28, 0
      %p128 = por %p126, %p127
      %p129 = scmp.ne.s32.totalorder %s117, %s118
      %p130 = scmp.eq.s32.totalorder %s29, 2
      %p131 = por %p129, %p130
      %p133 = scmp.ne.s32.totalorder %s118, %s132
      %p134 = scmp.eq.s32.totalorder %s29, 0
      %p135 = por %p133, %p134
      %s137 = sadd.s32 %s136, 1
      %p140 = scmp.eq.s32.totalorder %s23, 2
      %p141 = scmp.ne.s32.totalorder %s136, %s138
      %p142 = scmp.eq.s32.totalorder %s23, 0
      %p143 = por %p141, %p142
      %p144 = scmp.ne.s32.totalorder %s136, %s138
      %p145 = scmp.eq.s32.totalorder %s28, 2
      %p146 = por %p144, %p145
      %p147 = scmp.ne.s32.totalorder %s138, %s139
      %p148 = scmp.eq.s32.totalorder %s28, 0
      %p149 = por %p147, %p148
      %p150 = scmp.ne.s32.totalorder %s138, %s139
      %p151 = scmp.eq.s32.totalorder %s29, 2
      %p152 = por %p150, %p151
      %p154 = scmp.ne.s32.totalorder %s139, %s153
      %p155 = scmp.eq.s32.totalorder %s29, 0
      %p156 = por %p154, %p155
      %s157 = ssub.s32 %s23, %s30
      %p158 = scmp.eq.s32.totalorder %s157, 0
      %s160 = sadd.s32 %s159, 1
      %s161 = scalar_select %p158, %s159, %s160
      %p164 = pneg %p158
      %p165 = scmp.eq.s32.totalorder %s23, 2
      %p166 = por %p164, %p165
      %p167 = scmp.ne.s32.totalorder %s159, %s162
      %p168 = scmp.eq.s32.totalorder %s23, 0
      %p169 = por %p167, %p168
      %p170 = scmp.ne.s32.totalorder %s159, %s162
      %p171 = scmp.eq.s32.totalorder %s28, 2
      %p172 = por %p170, %p171
      %p173 = scmp.ne.s32.totalorder %s162, %s163
      %p174 = scmp.eq.s32.totalorder %s28, 0
      %p175 = por %p173, %p174
      %p176 = scmp.ne.s32.totalorder %s162, %s163
      %p177 = scmp.eq.s32.totalorder %s29, 2
      %p178 = por %p176, %p177
      %p180 = scmp.ne.s32.totalorder %s163, %s179
      %p181 = scmp.eq.s32.totalorder %s29, 0
      %p182 = por %p180, %p181
      %s183 = ssub.s32 %s23, %s30
      %p184 = scmp.eq.s32.totalorder %s183, 0
      %s186 = sadd.s32 %s185, 1
      %s187 = scalar_select %p184, %s185, %s186
      %p190 = pneg %p184
      %p191 = scmp.eq.s32.totalorder %s23, 2
      %p192 = por %p190, %p191
      %p193 = scmp.ne.s32.totalorder %s185, %s188
      %p194 = scmp.eq.s32.totalorder %s23, 0
      %p195 = por %p193, %p194
      %p196 = scmp.ne.s32.totalorder %s185, %s188
      %p197 = scmp.eq.s32.totalorder %s28, 2
      %p198 = por %p196, %p197
      %p199 = scmp.ne.s32.totalorder %s188, %s189
      %p200 = scmp.eq.s32.totalorder %s28, 0
      %p201 = por %p199, %p200
      %p202 = scmp.ne.s32.totalorder %s188, %s189
      %p203 = scmp.eq.s32.totalorder %s29, 2
      %p204 = por %p202, %p203
      %p206 = scmp.ne.s32.totalorder %s189, %s205
      %p207 = scmp.eq.s32.totalorder %s29, 0
      %p208 = por %p206, %p207
      %p209 = scmp.le.s32.totalorder 1, %s23
      %p210 = scmp.lt.s32.totalorder %s23, 4
      %p211 = pnand %p209, %p210
      %p212 = pneg %p211
      // Predicated region
      $region9: #{mlp_forward.1} parent=5 // pred_check
        _
      $region10: #{mlp_forward.1} parent=5 // pred_check_branch
        %214 = sbr.rel (%p211) target = $region12
      $region11: #{mlp_forward.1} parent=5 // pred_region
        %s215 = ssub.s32 %s23, 1
        // Predicated region
        $region13: #{mlp_forward.1} parent=11 // pred_check
          %p216 = pneg %p44
        $region14: #{mlp_forward.1} parent=11 // pred_check_branch
          %218 = sbr.rel (%p216) target = $region16
        $region15: #{mlp_forward.1} parent=11 // pred_region
          %s220 = ssub.s32 64, 64
          %221 = vsyncadd [#allocation6], %s220
          %224 = dma.hbm_to_smem %s0, 64, [#allocation3], [#allocation6]
        $region16: #{mlp_forward.1} parent=11 // pred_fallthru
          _
        // Predicated region
        $region17: #{mlp_forward.1} parent=11 // pred_check
          %p225 = pneg %p65
        $region18: #{mlp_forward.1} parent=11 // pred_check_branch
          %227 = sbr.rel (%p225) target = $region20
        $region19: #{mlp_forward.1} parent=11 // pred_region
          %s229 = ssub.s32 16, 16
          %230 = vsyncadd [#allocation8], %s229
          %233 = dma.hbm_to_smem %s1, 16, [#allocation7], [#allocation8]
        $region20: #{mlp_forward.1} parent=11 // pred_fallthru
          _
        // Predicated region
        $region21: #{mlp_forward.1} parent=11 // pred_check
          %p234 = pneg %p86
        $region22: #{mlp_forward.1} parent=11 // pred_check_branch
          %236 = sbr.rel (%p234) target = $region24
        $region23: #{mlp_forward.1} parent=11 // pred_region
          %s238 = ssub.s32 128, 128
          %239 = vsyncadd [#allocation8], %s238
          %242 = dma.hbm_to_smem %s2, 128, [#allocation9], [#allocation8]
        $region24: #{mlp_forward.1} parent=11 // pred_fallthru
          _
        // Predicated region
        $region25: #{mlp_forward.1} parent=11 // pred_check
          %p243 = pneg %p107
        $region26: #{mlp_forward.1} parent=11 // pred_check_branch
          %245 = sbr.rel (%p243) target = $region28
        $region27: #{mlp_forward.1} parent=11 // pred_region
          %s247 = ssub.s32 16, 16
          %248 = vsyncadd [#allocation11], %s247
          %251 = dma.hbm_to_smem %s3, 16, [#allocation10], [#allocation11]
        $region28: #{mlp_forward.1} parent=11 // pred_fallthru
          _
        // Predicated region
        $region29: #{mlp_forward.1} parent=11 // pred_check
          %p252 = pneg %p128
        $region30: #{mlp_forward.1} parent=11 // pred_check_branch
          %254 = sbr.rel (%p252) target = $region32
        $region31: #{mlp_forward.1} parent=11 // pred_region
          %s256 = ssub.s32 64, 64
          %257 = vsyncadd [#allocation11], %s256
          %260 = dma.hbm_to_smem %s4, 64, [#allocation12], [#allocation11]
        $region32: #{mlp_forward.1} parent=11 // pred_fallthru
          _
        // Predicated region
        $region33: #{mlp_forward.1} parent=11 // pred_check
          %p261 = pneg %p149
        $region34: #{mlp_forward.1} parent=11 // pred_check_branch
          %263 = sbr.rel (%p261) target = $region36
        $region35: #{mlp_forward.1} parent=11 // pred_region
          _
        $region36: #{mlp_forward.1} parent=11 // pred_fallthru
          _
      $region12: #{mlp_forward.1} parent=5 // pred_fallthru
        _
      %p264 = scmp.lt.s32.totalorder %s23, 3
      // Predicated region
      $region37: #{mlp_forward.1} parent=5 // pred_check
        %p265 = pneg %p264
      $region38: #{mlp_forward.1} parent=5 // pred_check_branch
        %267 = sbr.rel (%p265) target = $region40
      $region39: #{mlp_forward.1} parent=5 // pred_region
        // Predicated region
        $region41: #{mlp_forward.1} parent=39 // pred_check
          %p268 = pneg %p169
        $region42: #{mlp_forward.1} parent=39 // pred_check_branch
          %270 = sbr.rel (%p268) target = $region44
        $region43: #{mlp_forward.1} parent=39 // pred_region
          %s271 = sand.u32 %s159, 1
          %s272 = scalar_lea.sflag [#allocation4], %s271
          %s273 = sand.u32 %s159, 1
          %s274 = smul.addr %s273, 4
          %s275 = scalar_lea.vmem [#allocation13], %s274
          %s277 = ssub.s32 64, 64
          %278 = vsyncadd %s272, %s277
          %s279 = smul.addr %s23, 64
          %s280 = scalar_lea.hbm %s6, %s279
          %s282 = sshll.u32 %s275, 4
          %s283 = int_to_ptr.vmem [resolvable:$true] %s282
          %285 = dma.hbm_to_vmem [thread:$0]  %s280, 64, %s283, %s272
        $region44: #{mlp_forward.1} parent=39 // pred_fallthru
          _
      $region40: #{mlp_forward.1} parent=5 // pred_fallthru
        _
      %p286 = scmp.le.s32.totalorder 1, %s23
      %p287 = scmp.lt.s32.totalorder %s23, 4
      %p288 = pnand %p286, %p287
      %p289 = pneg %p288
      // Predicated region
      $region45: #{mlp_forward.1} parent=5 // pred_check
        _
      $region46: #{mlp_forward.1} parent=5 // pred_check_branch
        %291 = sbr.rel (%p288) target = $region48
      $region47: #{mlp_forward.1} parent=5 // pred_region
        %s292 = ssub.s32 %s23, 1
        // Predicated region
        $region49: #{mlp_forward.1} parent=47 // pred_check
          %p293 = pneg %p44
        $region50: #{mlp_forward.1} parent=47 // pred_check_branch
          %295 = sbr.rel (%p293) target = $region52
        $region51: #{mlp_forward.1} parent=47 // pred_region
          %296 = dma.done [#allocation6], 64
        $region52: #{mlp_forward.1} parent=47 // pred_fallthru
          _
        // Predicated region
        $region53: #{mlp_forward.1} parent=47 // pred_check
          %p297 = pneg %p65
        $region54: #{mlp_forward.1} parent=47 // pred_check_branch
          %299 = sbr.rel (%p297) target = $region56
        $region55: #{mlp_forward.1} parent=47 // pred_region
          %300 = dma.done [#allocation8], 16
        $region56: #{mlp_forward.1} parent=47 // pred_fallthru
          _
        // Predicated region
        $region57: #{mlp_forward.1} parent=47 // pred_check
          %p301 = pneg %p86
        $region58: #{mlp_forward.1} parent=47 // pred_check_branch
          %303 = sbr.rel (%p301) target = $region60
        $region59: #{mlp_forward.1} parent=47 // pred_region
          %304 = dma.done [#allocation8], 128
        $region60: #{mlp_forward.1} parent=47 // pred_fallthru
          _
        // Predicated region
        $region61: #{mlp_forward.1} parent=47 // pred_check
          %p305 = pneg %p107
        $region62: #{mlp_forward.1} parent=47 // pred_check_branch
          %307 = sbr.rel (%p305) target = $region64
        $region63: #{mlp_forward.1} parent=47 // pred_region
          %308 = dma.done [#allocation11], 16
        $region64: #{mlp_forward.1} parent=47 // pred_fallthru
          _
        // Predicated region
        $region65: #{mlp_forward.1} parent=47 // pred_check
          %p309 = pneg %p128
        $region66: #{mlp_forward.1} parent=47 // pred_check_branch
          %311 = sbr.rel (%p309) target = $region68
        $region67: #{mlp_forward.1} parent=47 // pred_region
          %312 = dma.done [#allocation11], 64
        $region68: #{mlp_forward.1} parent=47 // pred_fallthru
          _
        %s313 = sand.u32 %s162, 1
        %s314 = scalar_lea.sflag [#allocation4], %s313
        %s315 = sand.u32 %s162, 1
        %s316 = smul.addr %s315, 4
        %s317 = scalar_lea.vmem [#allocation13], %s316
        // Predicated region
        $region69: #{mlp_forward.1} parent=47 // pred_check
          %p318 = pneg %p175
        $region70: #{mlp_forward.1} parent=47 // pred_check_branch
          %320 = sbr.rel (%p318) target = $region72
        $region71: #{mlp_forward.1} parent=47 // pred_region
          %321 = dma.done %s314, 64
        $region72: #{mlp_forward.1} parent=47 // pred_fallthru
          _
        %322 = sfence
        %p323 = pneg %p44
        %p324 = pneg %p41
        %p325 = pneg %p65
        %p326 = pneg %p62
        %p327 = pneg %p86
        %p328 = pneg %p83
        %p329 = pneg %p107
        %p330 = pneg %p104
        %p331 = pneg %p128
        %p332 = pneg %p125
        %p333 = pneg %p149
        %p334 = pneg %p146
        %s335 = sand.u32 %s162, 1
        %s336 = scalar_lea.sflag [#allocation4], %s335
        %s337 = sand.u32 %s162, 1
        %s338 = smul.addr %s337, 4
        %s339 = scalar_lea.vmem [#allocation13], %s338
        %p340 = pneg %p175
        %p341 = pneg %p172
        %p342 = pneg %p201
        %p343 = pneg %p198
        %s344 = sand.u32 %s188, 1
        %s345 = scalar_lea.sflag [#allocation5], %s344
        %s346 = sand.u32 %s188, 1
        %s347 = scalar_lea.vmem [#allocation14], %s346
        %v348 = vld [vmem:[%s317] sm:$0xf]
        %s349 = sld [smem:[#allocation3]]
        %v350 = vstv %s349
        %v351 = vmul.f32 %v348, %v350
        %s352 = sld [smem:[#allocation3 + $0x80]]
        %v353 = vstv %s352
        %v354 = vmul.f32 %v348, %v353
        %v356 = vrot.slane %v354, 1
        %v358 = vadd.f32 %v351, %v356
        %s359 = sld [smem:[#allocation3 + $0x100]]
        %v360 = vstv %s359
        %v361 = vmul.f32 %v348, %v360
        %v363 = vrot.slane %v361, 2
        %v365 = vadd.f32 %v358, %v363
        %s366 = sld [smem:[#allocation3 + $0x180]]
        %v367 = vstv %s366
        %v368 = vmul.f32 %v348, %v367
        %v370 = vrot.slane %v368, 3
        %v372 = vadd.f32 %v365, %v370
        %s373 = sld [smem:[#allocation7]]
        %v374 = vstv %s373
        %v375 = vadd.f32 %v372, %v374
        %v376 = vmul.f32 %v375, 0.5
        %v377 = vtanh.pop %v376
        %v378 = vmul.f32 %v377, 0.5
        %v379 = vadd.f32 %v378, 0.5
        %s380 = sld [smem:[#allocation3 + $0x1]]
        %v381 = vstv %s380
        %v382 = vmul.f32 %v348, %v381
        %s383 = sld [smem:[#allocation3 + $0x81]]
        %v384 = vstv %s383
        %v385 = vmul.f32 %v348, %v384
        %v387 = vrot.slane %v385, 1
        %v389 = vadd.f32 %v382, %v387
        %s390 = sld [smem:[#allocation3 + $0x101]]
        %v391 = vstv %s390
        %v392 = vmul.f32 %v348, %v391
        %v394 = vrot.slane %v392, 2
        %v396 = vadd.f32 %v389, %v394
        %s397 = sld [smem:[#allocation3 + $0x181]]
        %v398 = vstv %s397
        %v399 = vmul.f32 %v348, %v398
        %v401 = vrot.slane %v399, 3
        %v403 = vadd.f32 %v396, %v401
        %s404 = sld [smem:[#allocation7 + $0x1]]
        %v405 = vstv %s404
        %v406 = vadd.f32 %v403, %v405
        %v407 = vmul.f32 %v406, 0.5
        %v408 = vtanh.pop %v407
        %v409 = vmul.f32 %v408, 0.5
        %v410 = vadd.f32 %v409, 0.5
        %s411 = sld [smem:[#allocation3 + $0x2]]
        %v412 = vstv %s411
        %v413 = vmul.f32 %v348, %v412
        %s414 = sld [smem:[#allocation3 + $0x82]]
        %v415 = vstv %s414
        %v416 = vmul.f32 %v348, %v415
        %v418 = vrot.slane %v416, 1
        %v420 = vadd.f32 %v413, %v418
        %s421 = sld [smem:[#allocation3 + $0x102]]
        %v422 = vstv %s421
        %v423 = vmul.f32 %v348, %v422
        %v425 = vrot.slane %v423, 2
        %v427 = vadd.f32 %v420, %v425
        %s428 = sld [smem:[#allocation3 + $0x182]]
        %v429 = vstv %s428
        %v430 = vmul.f32 %v348, %v429
        %v432 = vrot.slane %v430, 3
        %v434 = vadd.f32 %v427, %v432
        %s435 = sld [smem:[#allocation7 + $0x2]]
        %v436 = vstv %s435
        %v437 = vadd.f32 %v434, %v436
        %v438 = vmul.f32 %v437, 0.5
        %v439 = vtanh.pop %v438
        %v440 = vmul.f32 %v439, 0.5
        %v441 = vadd.f32 %v440, 0.5
        %s442 = sld [smem:[#allocation3 + $0x3]]
        %v443 = vstv %s442
        %v444 = vmul.f32 %v348, %v443
        %s445 = sld [smem:[#allocation3 + $0x83]]
        %v446 = vstv %s445
        %v447 = vmul.f32 %v348, %v446
        %v449 = vrot.slane %v447, 1
        %v451 = vadd.f32 %v444, %v449
        %s452 = sld [smem:[#allocation3 + $0x103]]
        %v453 = vstv %s452
        %v454 = vmul.f32 %v348, %v453
        %v456 = vrot.slane %v454, 2
        %v458 = vadd.f32 %v451, %v456
        %s459 = sld [smem:[#allocation3 + $0x183]]
        %v460 = vstv %s459
        %v461 = vmul.f32 %v348, %v460
        %v463 = vrot.slane %v461, 3
        %v465 = vadd.f32 %v458, %v463
        %s466 = sld [smem:[#allocation7 + $0x3]]
        %v467 = vstv %s466
        %v468 = vadd.f32 %v465, %v467
        %v469 = vmul.f32 %v468, 0.5
        %v470 = vtanh.pop %v469
        %v471 = vmul.f32 %v470, 0.5
        %v472 = vadd.f32 %v471, 0.5
        %s473 = sld [smem:[#allocation3 + $0x4]]
        %v474 = vstv %s473
        %v475 = vmul.f32 %v348, %v474
        %s476 = sld [smem:[#allocation3 + $0x84]]
        %v477 = vstv %s476
        %v478 = vmul.f32 %v348, %v477
        %v480 = vrot.slane %v478, 1
        %v482 = vadd.f32 %v475, %v480
        %s483 = sld [smem:[#allocation3 + $0x104]]
        %v484 = vstv %s483
        %v485 = vmul.f32 %v348, %v484
        %v487 = vrot.slane %v485, 2
        %v489 = vadd.f32 %v482, %v487
        %s490 = sld [smem:[#allocation3 + $0x184]]
        %v491 = vstv %s490
        %v492 = vmul.f32 %v348, %v491
        %v494 = vrot.slane %v492, 3
        %v496 = vadd.f32 %v489, %v494
        %s497 = sld [smem:[#allocation7 + $0x4]]
        %v498 = vstv %s497
        %v499 = vadd.f32 %v496, %v498
        %v500 = vmul.f32 %v499, 0.5
        %v501 = vtanh.pop %v500
        %v502 = vmul.f32 %v501, 0.5
        %v503 = vadd.f32 %v502, 0.5
        %s504 = sld [smem:[#allocation3 + $0x5]]
        %v505 = vstv %s504
        %v506 = vmul.f32 %v348, %v505
        %s507 = sld [smem:[#allocation3 + $0x85]]
        %v508 = vstv %s507
        %v509 = vmul.f32 %v348, %v508
        %v511 = vrot.slane %v509, 1
        %v513 = vadd.f32 %v506, %v511
        %s514 = sld [smem:[#allocation3 + $0x105]]
        %v515 = vstv %s514
        %v516 = vmul.f32 %v348, %v515
        %v518 = vrot.slane %v516, 2
        %v520 = vadd.f32 %v513, %v518
        %s521 = sld [smem:[#allocation3 + $0x185]]
        %v522 = vstv %s521
        %v523 = vmul.f32 %v348, %v522
        %v525 = vrot.slane %v523, 3
        %v527 = vadd.f32 %v520, %v525
        %s528 = sld [smem:[#allocation7 + $0x5]]
        %v529 = vstv %s528
        %v530 = vadd.f32 %v527, %v529
        %v531 = vmul.f32 %v530, 0.5
        %v532 = vtanh.pop %v531
        %v533 = vmul.f32 %v532, 0.5
        %v534 = vadd.f32 %v533, 0.5
        %s535 = sld [smem:[#allocation3 + $0x6]]
        %v536 = vstv %s535
        %v537 = vmul.f32 %v348, %v536
        %s538 = sld [smem:[#allocation3 + $0x86]]
        %v539 = vstv %s538
        %v540 = vmul.f32 %v348, %v539
        %v542 = vrot.slane %v540, 1
        %v544 = vadd.f32 %v537, %v542
        %s545 = sld [smem:[#allocation3 + $0x106]]
        %v546 = vstv %s545
        %v547 = vmul.f32 %v348, %v546
        %v549 = vrot.slane %v547, 2
        %v551 = vadd.f32 %v544, %v549
        %s552 = sld [smem:[#allocation3 + $0x186]]
        %v553 = vstv %s552
        %v554 = vmul.f32 %v348, %v553
        %v556 = vrot.slane %v554, 3
        %v558 = vadd.f32 %v551, %v556
        %s559 = sld [smem:[#allocation7 + $0x6]]
        %v560 = vstv %s559
        %v561 = vadd.f32 %v558, %v560
        %v562 = vmul.f32 %v561, 0.5
        %v563 = vtanh.pop %v562
        %v564 = vmul.f32 %v563, 0.5
        %v565 = vadd.f32 %v564, 0.5
        %s566 = sld [smem:[#allocation3 + $0x7]]
        %v567 = vstv %s566
        %v568 = vmul.f32 %v348, %v567
        %s569 = sld [smem:[#allocation3 + $0x87]]
        %v570 = vstv %s569
        %v571 = vmul.f32 %v348, %v570
        %v573 = vrot.slane %v571, 1
        %v575 = vadd.f32 %v568, %v573
        %s576 = sld [smem:[#allocation3 + $0x107]]
        %v577 = vstv %s576
        %v578 = vmul.f32 %v348, %v577
        %v580 = vrot.slane %v578, 2
        %v582 = vadd.f32 %v575, %v580
        %s583 = sld [smem:[#allocation3 + $0x187]]
        %v584 = vstv %s583
        %v585 = vmul.f32 %v348, %v584
        %v587 = vrot.slane %v585, 3
        %v589 = vadd.f32 %v582, %v587
        %s590 = sld [smem:[#allocation7 + $0x7]]
        %v591 = vstv %s590
        %v592 = vadd.f32 %v589, %v591
        %v593 = vmul.f32 %v592, 0.5
        %v594 = vtanh.pop %v593
        %v595 = vmul.f32 %v594, 0.5
        %v596 = vadd.f32 %v595, 0.5
        %s597 = sld [smem:[#allocation9]]
        %v598 = vstv %s597
        %v599 = vmul.f32 %v379, %v598
        %s600 = sld [smem:[#allocation9 + $0x80]]
        %v601 = vstv %s600
        %v602 = vmul.f32 %v410, %v601
        %v603 = vadd.f32 %v599, %v602
        %s604 = sld [smem:[#allocation9 + $0x100]]
        %v605 = vstv %s604
        %v606 = vmul.f32 %v441, %v605
        %v607 = vadd.f32 %v603, %v606
        %s608 = sld [smem:[#allocation9 + $0x180]]
        %v609 = vstv %s608
        %v610 = vmul.f32 %v472, %v609
        %v611 = vadd.f32 %v607, %v610
        %s612 = sld [smem:[#allocation9 + $0x200]]
        %v613 = vstv %s612
        %v614 = vmul.f32 %v503, %v613
        %v615 = vadd.f32 %v611, %v614
        %s616 = sld [smem:[#allocation9 + $0x280]]
        %v617 = vstv %s616
        %v618 = vmul.f32 %v534, %v617
        %v619 = vadd.f32 %v615, %v618
        %s620 = sld [smem:[#allocation9 + $0x300]]
        %v621 = vstv %s620
        %v622 = vmul.f32 %v565, %v621
        %v623 = vadd.f32 %v619, %v622
        %s624 = sld [smem:[#allocation9 + $0x380]]
        %v625 = vstv %s624
        %v626 = vmul.f32 %v596, %v625
        %v627 = vadd.f32 %v623, %v626
        %s628 = sld [smem:[#allocation10]]
        %v629 = vstv %s628
        %v630 = vadd.f32 %v627, %v629
        %v631 = vmul.f32 %v630, 0.5
        %v632 = vtanh.pop %v631
        %v633 = vmul.f32 %v632, 0.5
        %v634 = vadd.f32 %v633, 0.5
        %s635 = sld [smem:[#allocation9 + $0x1]]
        %v636 = vstv %s635
        %v637 = vmul.f32 %v379, %v636
        %s638 = sld [smem:[#allocation9 + $0x81]]
        %v639 = vstv %s638
        %v640 = vmul.f32 %v410, %v639
        %v641 = vadd.f32 %v637, %v640
        %s642 = sld [smem:[#allocation9 + $0x101]]
        %v643 = vstv %s642
        %v644 = vmul.f32 %v441, %v643
        %v645 = vadd.f32 %v641, %v644
        %s646 = sld [smem:[#allocation9 + $0x181]]
        %v647 = vstv %s646
        %v648 = vmul.f32 %v472, %v647
        %v649 = vadd.f32 %v645, %v648
        %s650 = sld [smem:[#allocation9 + $0x201]]
        %v651 = vstv %s650
        %v652 = vmul.f32 %v503, %v651
        %v653 = vadd.f32 %v649, %v652
        %s654 = sld [smem:[#allocation9 + $0x281]]
        %v655 = vstv %s654
        %v656 = vmul.f32 %v534, %v655
        %v657 = vadd.f32 %v653, %v656
        %s658 = sld [smem:[#allocation9 + $0x301]]
        %v659 = vstv %s658
        %v660 = vmul.f32 %v565, %v659
        %v661 = vadd.f32 %v657, %v660
        %s662 = sld [smem:[#allocation9 + $0x381]]
        %v663 = vstv %s662
        %v664 = vmul.f32 %v596, %v663
        %v665 = vadd.f32 %v661, %v664
        %s666 = sld [smem:[#allocation10 + $0x1]]
        %v667 = vstv %s666
        %v668 = vadd.f32 %v665, %v667
        %v669 = vmul.f32 %v668, 0.5
        %v670 = vtanh.pop %v669
        %v671 = vmul.f32 %v670, 0.5
        %v672 = vadd.f32 %v671, 0.5
        %s673 = sld [smem:[#allocation9 + $0x2]]
        %v674 = vstv %s673
        %v675 = vmul.f32 %v379, %v674
        %s676 = sld [smem:[#allocation9 + $0x82]]
        %v677 = vstv %s676
        %v678 = vmul.f32 %v410, %v677
        %v679 = vadd.f32 %v675, %v678
        %s680 = sld [smem:[#allocation9 + $0x102]]
        %v681 = vstv %s680
        %v682 = vmul.f32 %v441, %v681
        %v683 = vadd.f32 %v679, %v682
        %s684 = sld [smem:[#allocation9 + $0x182]]
        %v685 = vstv %s684
        %v686 = vmul.f32 %v472, %v685
        %v687 = vadd.f32 %v683, %v686
        %s688 = sld [smem:[#allocation9 + $0x202]]
        %v689 = vstv %s688
        %v690 = vmul.f32 %v503, %v689
        %v691 = vadd.f32 %v687, %v690
        %s692 = sld [smem:[#allocation9 + $0x282]]
        %v693 = vstv %s692
        %v694 = vmul.f32 %v534, %v693
        %v695 = vadd.f32 %v691, %v694
        %s696 = sld [smem:[#allocation9 + $0x302]]
        %v697 = vstv %s696
        %v698 = vmul.f32 %v565, %v697
        %v699 = vadd.f32 %v695, %v698
        %s700 = sld [smem:[#allocation9 + $0x382]]
        %v701 = vstv %s700
        %v702 = vmul.f32 %v596, %v701
        %v703 = vadd.f32 %v699, %v702
        %s704 = sld [smem:[#allocation10 + $0x2]]
        %v705 = vstv %s704
        %v706 = vadd.f32 %v703, %v705
        %v707 = vmul.f32 %v706, 0.5
        %v708 = vtanh.pop %v707
        %v709 = vmul.f32 %v708, 0.5
        %v710 = vadd.f32 %v709, 0.5
        %s711 = sld [smem:[#allocation9 + $0x3]]
        %v712 = vstv %s711
        %v713 = vmul.f32 %v379, %v712
        %s714 = sld [smem:[#allocation9 + $0x83]]
        %v715 = vstv %s714
        %v716 = vmul.f32 %v410, %v715
        %v717 = vadd.f32 %v713, %v716
        %s718 = sld [smem:[#allocation9 + $0x103]]
        %v719 = vstv %s718
        %v720 = vmul.f32 %v441, %v719
        %v721 = vadd.f32 %v717, %v720
        %s722 = sld [smem:[#allocation9 + $0x183]]
        %v723 = vstv %s722
        %v724 = vmul.f32 %v472, %v723
        %v725 = vadd.f32 %v721, %v724
        %s726 = sld [smem:[#allocation9 + $0x203]]
        %v727 = vstv %s726
        %v728 = vmul.f32 %v503, %v727
        %v729 = vadd.f32 %v725, %v728
        %s730 = sld [smem:[#allocation9 + $0x283]]
        %v731 = vstv %s730
        %v732 = vmul.f32 %v534, %v731
        %v733 = vadd.f32 %v729, %v732
        %s734 = sld [smem:[#allocation9 + $0x303]]
        %v735 = vstv %s734
        %v736 = vmul.f32 %v565, %v735
        %v737 = vadd.f32 %v733, %v736
        %s738 = sld [smem:[#allocation9 + $0x383]]
        %v739 = vstv %s738
        %v740 = vmul.f32 %v596, %v739
        %v741 = vadd.f32 %v737, %v740
        %s742 = sld [smem:[#allocation10 + $0x3]]
        %v743 = vstv %s742
        %v744 = vadd.f32 %v741, %v743
        %v745 = vmul.f32 %v744, 0.5
        %v746 = vtanh.pop %v745
        %v747 = vmul.f32 %v746, 0.5
        %v748 = vadd.f32 %v747, 0.5
        %s749 = sld [smem:[#allocation12]]
        %v750 = vstv %s749
        %v751 = vmul.f32 %v634, %v750
        %s752 = sld [smem:[#allocation12 + $0x80]]
        %v753 = vstv %s752
        %v754 = vmul.f32 %v672, %v753
        %v755 = vadd.f32 %v751, %v754
        %s756 = sld [smem:[#allocation12 + $0x100]]
        %v757 = vstv %s756
        %v758 = vmul.f32 %v710, %v757
        %v759 = vadd.f32 %v755, %v758
        %s760 = sld [smem:[#allocation12 + $0x180]]
        %v761 = vstv %s760
        %v762 = vmul.f32 %v748, %v761
        %v763 = vadd.f32 %v759, %v762
        %s764 = sld [smem:[#allocation2]]
        %v765 = vstv %s764
        %v766 = vadd.f32 %v763, %v765
        %v767 = vmul.f32 %v766, 0.5
        %v768 = vtanh.pop %v767
        %v769 = vmul.f32 %v768, 0.5
        %v770 = vadd.f32 %v769, 0.5
        %771 = vst [vmem:[%s347] sm:$0x1] %v770
        %s772 = sand.u32 %s188, 1
        %s773 = scalar_lea.sflag [#allocation5], %s772
        %s774 = sand.u32 %s188, 1
        %s775 = scalar_lea.vmem [#allocation14], %s774
        // Predicated region
        $region73: #{mlp_forward.1} parent=47 // pred_check
          %p776 = pneg %p198
        $region74: #{mlp_forward.1} parent=47 // pred_check_branch
          %778 = sbr.rel (%p776) target = $region76
        $region75: #{mlp_forward.1} parent=47 // pred_region
          %s780 = ssub.s32 16, 16
          %781 = vsyncadd %s773, %s780
          %s782 = smul.addr %s28, 16
          %s783 = scalar_lea.hbm %s7, %s782
          %s785 = sshll.u32 %s775, 4
          %s786 = int_to_ptr.vmem [resolvable:$true] %s785
          %788 = dma.vmem_to_hbm [thread:$0]  %s786, 16, %s783, %s773
        $region76: #{mlp_forward.1} parent=47 // pred_fallthru
          _
      $region48: #{mlp_forward.1} parent=5 // pred_fallthru
        _
      %p789 = scmp.le.s32.totalorder 2, %s23
      // Predicated region
      $region77: #{mlp_forward.1} parent=5 // pred_check
        %p790 = pneg %p789
      $region78: #{mlp_forward.1} parent=5 // pred_check_branch
        %792 = sbr.rel (%p790) target = $region80
      $region79: #{mlp_forward.1} parent=5 // pred_region
        %s793 = ssub.s32 %s23, 2
        // Predicated region
        $region81: #{mlp_forward.1} parent=79 // pred_check
          %p794 = pneg %p204
        $region82: #{mlp_forward.1} parent=79 // pred_check_branch
          %796 = sbr.rel (%p794) target = $region84
        $region83: #{mlp_forward.1} parent=79 // pred_region
          %s797 = sand.u32 %s189, 1
          %s798 = scalar_lea.sflag [#allocation5], %s797
          %s799 = sand.u32 %s189, 1
          %s800 = scalar_lea.vmem [#allocation14], %s799
          %801 = dma.done %s798, 16
        $region84: #{mlp_forward.1} parent=79 // pred_fallthru
          _
      $region80: #{mlp_forward.1} parent=5 // pred_fallthru
        _
    $region6: #{mlp_forward.1} parent=1 // loop_footer
      %s27 = sadd.s32 1, %s23
    $region7: #{mlp_forward.1} parent=1 // loop_footer_branch
      %22 = sbr.rel target = $region3
    $region8: #{mlp_forward.1} parent=1 // loop_exit
      _
    %802 = vsyncpa [#allocation4], 1
    %s803 = scalar_lea.sflag [#allocation4], 1
    %804 = vsyncpa %s803, 1
    %805 = vsyncpa [#allocation5], 1
    %s806 = scalar_lea.sflag [#allocation5], 1
    %807 = vsyncpa %s806, 1
    %808 = vsyncpa [#allocation6], 1
    %s809 = scalar_lea.sflag [#allocation6], 1
    %810 = vsyncpa %s809, 1
    %811 = vsyncpa [#allocation8], 1
    %812 = vsyncpa [#allocation11], 1

</llo_original>
